<compile_context>
chip_gen: v7x
topology: tpu7x:2x2x1
jax: 0.10.0
libtpu: 0.0.40
codegen_flags: <defaults>
</compile_context>

<pallas_src>
import jax
import jax.numpy as jnp
import numpy as np
from jax import lax
from jax.experimental import pallas as pl
from jax.experimental.pallas import tpu as pltpu

# ---- globals from the original source (chosen small, deterministic) ----
dimR = 16            # number of relation classes
Encodered_dim = 64   # sentence-encoding dim E
Att_dropout = 0.1    # identity at inference


# ---------------------------------------------------------------------------
# Pallas kernel: masked per-bag attention pooling + scoring + log_softmax
# ---------------------------------------------------------------------------
def multire_kernel(attn_en_ref, attn_zh_ref, inp_en_ref, inp_zh_ref,
                   off_en_ref, len_en_ref, off_zh_ref, len_zh_ref,
                   rvec_ref, wm_ref, bm_ref, onehot_ref, out_ref):
    # attn_en/zh: (NumRe, TotalEn/Zh) relation-sentence score logits
    # inp_en/zh:  (TotalEn/Zh, E)     encoded sentences
    # off/len:    (NumIn, 1) int32    per-instance segment offset / length
    # rvec:       (NumIn, NumRe, E)   R_vec (relation emb at first sentence)
    # wm:         (E, dimR) pre-transposed nn.Linear weight, bm: (1, dimR)
    # onehot:     (NumIn, NumRe, dimR) float re_mask (one True per (i, j))
    # out:        (NumIn, NumRe)
    NumIn, NumRe = out_ref.shape
    TotalEn = attn_en_ref.shape[1]
    TotalZh = attn_zh_ref.shape[1]
    E = inp_en_ref.shape[1]
    nR = wm_ref.shape[1]
    NEG = jnp.float32(-1e30)

    # ---- per-instance segment masks from (offset, length), built in-vreg ----
    off_en = off_en_ref[...]                                   # (NumIn, 1)
    len_en = len_en_ref[...]
    off_zh = off_zh_ref[...]
    len_zh = len_zh_ref[...]
    col_en = lax.broadcasted_iota(jnp.int32, (NumIn, TotalEn), 1)
    col_zh = lax.broadcasted_iota(jnp.int32, (NumIn, TotalZh), 1)
    mask_en = (col_en >= off_en) & (col_en < off_en + len_en)  # (NumIn, TotalEn)
    mask_zh = (col_zh >= off_zh) & (col_zh < off_zh + len_zh)  # (NumIn, TotalZh)

    # ---- joint (en ++ zh) masked softmax over each instance's sentences ----
    attn_en = attn_en_ref[...]                                 # (NumRe, TotalEn)
    attn_zh = attn_zh_ref[...]                                 # (NumRe, TotalZh)
    a_en = jnp.where(mask_en[:, None, :], attn_en[None, :, :], NEG)  # (NumIn,NumRe,TEn)
    a_zh = jnp.where(mask_zh[:, None, :], attn_zh[None, :, :], NEG)  # (NumIn,NumRe,TZh)
    m = jnp.maximum(jnp.max(a_en, axis=-1), jnp.max(a_zh, axis=-1))  # (NumIn, NumRe)
    m = m[:, :, None]
    e_en = jnp.exp(a_en - m)          # masked-out entries underflow to exactly 0
    e_zh = jnp.exp(a_zh - m)
    denom = jnp.sum(e_en, axis=-1) + jnp.sum(e_zh, axis=-1)          # (NumIn, NumRe)

    # ---- attention-weighted pooling: one MXU matmul per language ----
    e_en_f = e_en.reshape(NumIn * NumRe, TotalEn)
    e_zh_f = e_zh.reshape(NumIn * NumRe, TotalZh)
    s_flat = (jnp.dot(e_en_f, inp_en_ref[...], preferred_element_type=jnp.float32) +
              jnp.dot(e_zh_f, inp_zh_ref[...], preferred_element_type=jnp.float32))
    s_flat = s_flat / denom.reshape(NumIn * NumRe, 1)                # (NI*NR, E)
    # dropout on S is identity at inference

    # ---- scoring: M(S) + <R_vec, S>, then log_softmax over relations ----
    rvec_f = rvec_ref[...].reshape(NumIn * NumRe, E)
    rbias = jnp.sum(rvec_f * s_flat, axis=-1, keepdims=True)         # (NI*NR, 1)
    logits = (jnp.dot(s_flat, wm_ref[...], preferred_element_type=jnp.float32)
              + bm_ref[...] + rbias)                                 # (NI*NR, dimR)
    lmax = jnp.max(logits, axis=-1, keepdims=True)
    lse = lmax + jnp.log(jnp.sum(jnp.exp(logits - lmax), axis=-1, keepdims=True))
    p_n = (logits - lse).reshape(NumIn, NumRe, nR)

    # ---- re_mask select (exactly one True per (instance, relation) row) ----
    out_ref[...] = jnp.sum(p_n * onehot_ref[...], axis=-1)


# ---------------------------------------------------------------------------
# MultiRE.forward in JAX (embedding/gather glue + fused Pallas kernel)
# ---------------------------------------------------------------------------
def multire_forward(params, inp_en, r_en, l_en, inp_zh, r_zh, l_zh, re_mask):
    emb = params["relation_emb"]            # (dimR, E)
    w_m = params["w_m"]                     # (E, dimR)  pre-transposed Linear weight
    b_m = params["b_m"]                     # (1, dimR)

    NumRe, TotalEn = r_en.shape
    TotalZh = r_zh.shape[1]
    NumIn = l_en.shape[0]

    # --- glue: embedding gathers + relation/sentence score logits ---
    rel_en = jnp.take(emb, r_en, axis=0)                        # (NumRe, TotalEn, E)
    rel_zh = jnp.take(emb, r_zh, axis=0)                        # (NumRe, TotalZh, E)
    attn_en = jnp.sum(rel_en * inp_en[None, :, :], axis=2)      # (NumRe, TotalEn)
    attn_zh = jnp.sum(rel_zh * inp_zh[None, :, :], axis=2)      # (NumRe, TotalZh)

    # --- glue: per-instance segment offsets + R_vec gather / select ---
    off_en = jnp.concatenate([jnp.zeros((1,), jnp.int32),
                              jnp.cumsum(l_en)[:-1].astype(jnp.int32)])
    off_zh = jnp.concatenate([jnp.zeros((1,), jnp.int32),
                              jnp.cumsum(l_zh)[:-1].astype(jnp.int32)])
    idx_en = jnp.clip(off_en, 0, TotalEn - 1)
    idx_zh = jnp.clip(off_zh, 0, TotalZh - 1)
    rvec_en = jnp.transpose(jnp.take(rel_en, idx_en, axis=1), (1, 0, 2))  # (NumIn,NumRe,E)
    rvec_zh = jnp.transpose(jnp.take(rel_zh, idx_zh, axis=1), (1, 0, 2))
    r_vec = jnp.where((l_en > 0)[:, None, None], rvec_en, rvec_zh)

    onehot = re_mask.astype(jnp.float32)                        # (NumIn, NumRe, dimR)

    vmem = pl.BlockSpec(memory_space=pltpu.MemorySpace.VMEM)
    return pl.pallas_call(
        multire_kernel,
        out_shape=jax.ShapeDtypeStruct((NumIn, NumRe), jnp.float32),
        in_specs=[vmem] * 12,
        out_specs=vmem,
    )(attn_en, attn_zh, inp_en, inp_zh,
      off_en.reshape(NumIn, 1), l_en.reshape(NumIn, 1).astype(jnp.int32),
      off_zh.reshape(NumIn, 1), l_zh.reshape(NumIn, 1).astype(jnp.int32),
      r_vec, w_m, b_m, onehot)


# ---------------------------------------------------------------------------
# Pure-numpy reference replicating the original torch per-instance loop
# ---------------------------------------------------------------------------
def multire_reference_np(params, inp_en, r_en, l_en, inp_zh, r_zh, l_zh, re_mask):
    emb = np.asarray(params["relation_emb"], np.float64)
    w_m = np.asarray(params["w_m"], np.float64)
    b_m = np.asarray(params["b_m"], np.float64).reshape(-1)
    inp_en = np.asarray(inp_en, np.float64)
    inp_zh = np.asarray(inp_zh, np.float64)
    r_en = np.asarray(r_en)
    r_zh = np.asarray(r_zh)
    l_en = np.asarray(l_en)
    l_zh = np.asarray(l_zh)
    mask = np.asarray(re_mask, np.float64)

    rel_en = emb[r_en]                                   # (NumRe, TotalEn, E)
    rel_zh = emb[r_zh]
    attn_en = np.sum(rel_en * inp_en[None], 2)
    attn_zh = np.sum(rel_zh * inp_zh[None], 2)
    NumIn, NumRe, E = l_en.shape[0], r_en.shape[0], emb.shape[1]

    def softmax(x, axis):
        x = x - x.max(axis=axis, keepdims=True)
        e = np.exp(x)
        return e / e.sum(axis=axis, keepdims=True)

    S = np.zeros((NumIn, NumRe, E))
    R_vec = np.zeros((NumIn, NumRe, E))
    L_en = L_zh = 0
    for i in range(NumIn):
        R_en = L_en + int(l_en[i])
        R_zh = L_zh + int(l_zh[i])
        if R_en > L_en and R_zh > L_zh:
            att = softmax(np.concatenate([attn_en[:, L_en:R_en], attn_zh[:, L_zh:R_zh]], 1), 1)
            sent = np.concatenate([inp_en[L_en:R_en], inp_zh[L_zh:R_zh]], 0)
            S[i] = att @ sent
            R_vec[i] = rel_en[:, L_en, :]
        elif R_en > L_en:
            att = softmax(attn_en[:, L_en:R_en], 1)
            S[i] = att @ inp_en[L_en:R_en]
            R_vec[i] = rel_en[:, L_en, :]
        elif R_zh > L_zh:
            att = softmax(attn_zh[:, L_zh:R_zh], 1)
            S[i] = att @ inp_zh[L_zh:R_zh]
            R_vec[i] = rel_zh[:, L_zh, :]
        L_en, L_zh = R_en, R_zh

    logits = S @ w_m + b_m + np.sum(R_vec * S, 2, keepdims=True)
    lmax = logits.max(-1, keepdims=True)
    lse = lmax + np.log(np.sum(np.exp(logits - lmax), -1, keepdims=True))
    p_n = logits - lse
    return np.sum(p_n * mask, -1)                        # == p_n[re_mask].view(NumIn, NumRe)


# ---------------------------------------------------------------------------
if __name__ == "__main__":
    key = jax.random.PRNGKey(0)
    NumIn, NumRe = 4, 8
    l_en = jnp.array([2, 0, 3, 1], jnp.int32)   # per-instance en sentence counts
    l_zh = jnp.array([1, 2, 0, 2], jnp.int32)   # per-instance zh sentence counts
    TotalEn = int(l_en.sum())
    TotalZh = int(l_zh.sum())

    ks = jax.random.split(key, 4)
    params = {
        "relation_emb": jax.random.normal(ks[0], (dimR, Encodered_dim), jnp.float32) * 0.1,
        "w_m": jax.random.normal(ks[1], (Encodered_dim, dimR), jnp.float32)
               * (1.0 / Encodered_dim ** 0.5),
        "b_m": jnp.zeros((1, dimR), jnp.float32),
    }
    inp_en = jax.random.normal(ks[2], (TotalEn, Encodered_dim), jnp.float32)
    inp_zh = jax.random.normal(ks[3], (TotalZh, Encodered_dim), jnp.float32)

    # candidate relation id per row j, replicated over all sentences (as in MNRE)
    r_ids = jnp.arange(NumRe, dtype=jnp.int32) % dimR
    r_en = jnp.broadcast_to(r_ids[:, None], (NumRe, TotalEn))
    r_zh = jnp.broadcast_to(r_ids[:, None], (NumRe, TotalZh))
    # re_mask: exactly one True per (instance, relation-candidate) row
    re_mask = jnp.broadcast_to(
        (jax.nn.one_hot(r_ids, dimR, dtype=jnp.float32) > 0)[None],
        (NumIn, NumRe, dimR))

    fwd = jax.jit(multire_forward)
    out = fwd(params, inp_en, r_en, l_en, inp_zh, r_zh, l_zh, re_mask)
    out = jax.block_until_ready(out)

    ref = multire_reference_np(params, inp_en, r_en, l_en, inp_zh, r_zh, l_zh, re_mask)

    assert out.shape == (NumIn, NumRe) and out.dtype == jnp.float32
    assert bool(jnp.all(jnp.isfinite(out)))
    assert bool(jnp.all(out <= 1e-6))       # log-probabilities are <= 0
    assert np.allclose(np.asarray(out), ref, rtol=1e-3, atol=1e-3)
    print("KERNEL_OK")
</pallas_src>

<mosaic_0001>
module attributes {stable_mosaic.version = 11 : i64} {
  func.func @multire_kernel(%arg0: memref<8x6xf32, #tpu.memory_space<vmem>>, %arg1: memref<8x5xf32, #tpu.memory_space<vmem>>, %arg2: memref<6x64xf32, #tpu.memory_space<vmem>>, %arg3: memref<5x64xf32, #tpu.memory_space<vmem>>, %arg4: memref<4x1xi32, #tpu.memory_space<vmem>>, %arg5: memref<4x1xi32, #tpu.memory_space<vmem>>, %arg6: memref<4x1xi32, #tpu.memory_space<vmem>>, %arg7: memref<4x1xi32, #tpu.memory_space<vmem>>, %arg8: memref<4x8x64xf32, #tpu.memory_space<vmem>>, %arg9: memref<64x16xf32, #tpu.memory_space<vmem>>, %arg10: memref<1x16xf32, #tpu.memory_space<vmem>>, %arg11: memref<4x8x16xf32, #tpu.memory_space<vmem>>, %arg12: memref<4x8xf32, #tpu.memory_space<vmem>>) attributes {dimension_semantics = [], scalar_prefetch = 0 : i64, scratch_operands = 0 : i64, tpu.core_type = #tpu.core_type<tc>} {
    %c0 = arith.constant 0 : index
    %c0_0 = arith.constant 0 : index
    %0 = vector.load %arg4[%c0, %c0_0] : memref<4x1xi32, #tpu.memory_space<vmem>>, vector<4x1xi32>
    %c0_1 = arith.constant 0 : index
    %c0_2 = arith.constant 0 : index
    %1 = vector.load %arg5[%c0_1, %c0_2] : memref<4x1xi32, #tpu.memory_space<vmem>>, vector<4x1xi32>
    %c0_3 = arith.constant 0 : index
    %c0_4 = arith.constant 0 : index
    %2 = vector.load %arg6[%c0_3, %c0_4] : memref<4x1xi32, #tpu.memory_space<vmem>>, vector<4x1xi32>
    %c0_5 = arith.constant 0 : index
    %c0_6 = arith.constant 0 : index
    %3 = vector.load %arg7[%c0_5, %c0_6] : memref<4x1xi32, #tpu.memory_space<vmem>>, vector<4x1xi32>
    %4 = tpu.iota {dimensions = array<i32: 1>} : vector<4x6xi32>
    %5 = tpu.iota {dimensions = array<i32: 1>} : vector<4x5xi32>
    %6 = vector.broadcast %0 : vector<4x1xi32> to vector<4x6xi32>
    %7 = arith.cmpi sge, %4, %6 : vector<4x6xi32>
    %8 = arith.addi %0, %1 : vector<4x1xi32>
    %9 = vector.broadcast %8 : vector<4x1xi32> to vector<4x6xi32>
    %10 = arith.cmpi slt, %4, %9 : vector<4x6xi32>
    %11 = arith.andi %7, %10 : vector<4x6xi1>
    %12 = vector.broadcast %2 : vector<4x1xi32> to vector<4x5xi32>
    %13 = arith.cmpi sge, %5, %12 : vector<4x5xi32>
    %14 = arith.addi %2, %3 : vector<4x1xi32>
    %15 = vector.broadcast %14 : vector<4x1xi32> to vector<4x5xi32>
    %16 = arith.cmpi slt, %5, %15 : vector<4x5xi32>
    %17 = arith.andi %13, %16 : vector<4x5xi1>
    %c0_7 = arith.constant 0 : index
    %c0_8 = arith.constant 0 : index
    %18 = vector.load %arg0[%c0_7, %c0_8] : memref<8x6xf32, #tpu.memory_space<vmem>>, vector<8x6xf32>
    %c0_9 = arith.constant 0 : index
    %c0_10 = arith.constant 0 : index
    %19 = vector.load %arg1[%c0_9, %c0_10] : memref<8x5xf32, #tpu.memory_space<vmem>>, vector<8x5xf32>
    %20 = vector.shape_cast %11 : vector<4x6xi1> to vector<4x1x6xi1>
    %21 = vector.shape_cast %18 : vector<8x6xf32> to vector<1x8x6xf32>
    %cst = arith.constant -1.000000e+30 : f32
    %22 = vector.shape_cast %20 : vector<4x1x6xi1> to vector<4x1x6xi1>
    %23 = vector.broadcast %22 : vector<4x1x6xi1> to vector<4x8x6xi1>
    %24 = vector.shape_cast %21 : vector<1x8x6xf32> to vector<1x8x6xf32>
    %25 = vector.broadcast %24 : vector<1x8x6xf32> to vector<4x8x6xf32>
    %26 = vector.broadcast %cst : f32 to vector<4x8x6xf32>
    %27 = arith.select %23, %25, %26 : vector<4x8x6xi1>, vector<4x8x6xf32>
    %28 = vector.shape_cast %17 : vector<4x5xi1> to vector<4x1x5xi1>
    %29 = vector.shape_cast %19 : vector<8x5xf32> to vector<1x8x5xf32>
    %cst_11 = arith.constant -1.000000e+30 : f32
    %30 = vector.shape_cast %28 : vector<4x1x5xi1> to vector<4x1x5xi1>
    %31 = vector.broadcast %30 : vector<4x1x5xi1> to vector<4x8x5xi1>
    %32 = vector.shape_cast %29 : vector<1x8x5xf32> to vector<1x8x5xf32>
    %33 = vector.broadcast %32 : vector<1x8x5xf32> to vector<4x8x5xf32>
    %34 = vector.broadcast %cst_11 : f32 to vector<4x8x5xf32>
    %35 = arith.select %31, %33, %34 : vector<4x8x5xi1>, vector<4x8x5xf32>
    %cst_12 = arith.constant dense<0xFF800000> : vector<4x8xf32>
    %36 = vector.multi_reduction <maximumf>, %27, %cst_12 [2] : vector<4x8x6xf32> to vector<4x8xf32>
    %cst_13 = arith.constant dense<0xFF800000> : vector<4x8xf32>
    %37 = vector.multi_reduction <maximumf>, %35, %cst_13 [2] : vector<4x8x5xf32> to vector<4x8xf32>
    %38 = arith.maximumf %36, %37 : vector<4x8xf32>
    %39 = vector.shape_cast %38 : vector<4x8xf32> to vector<4x8x1xf32>
    %40 = vector.broadcast %39 : vector<4x8x1xf32> to vector<4x8x6xf32>
    %41 = arith.subf %27, %40 : vector<4x8x6xf32>
    %42 = math.exp %41 : vector<4x8x6xf32>
    %43 = vector.broadcast %39 : vector<4x8x1xf32> to vector<4x8x5xf32>
    %44 = arith.subf %35, %43 : vector<4x8x5xf32>
    %45 = math.exp %44 : vector<4x8x5xf32>
    %cst_14 = arith.constant dense<0.000000e+00> : vector<4x8xf32>
    %46 = vector.multi_reduction <add>, %42, %cst_14 [2] : vector<4x8x6xf32> to vector<4x8xf32>
    %cst_15 = arith.constant dense<0.000000e+00> : vector<4x8xf32>
    %47 = vector.multi_reduction <add>, %45, %cst_15 [2] : vector<4x8x5xf32> to vector<4x8xf32>
    %48 = arith.addf %46, %47 : vector<4x8xf32>
    %49 = vector.shape_cast %42 : vector<4x8x6xf32> to vector<32x6xf32>
    %50 = vector.shape_cast %45 : vector<4x8x5xf32> to vector<32x5xf32>
    %c0_16 = arith.constant 0 : index
    %c0_17 = arith.constant 0 : index
    %51 = vector.load %arg2[%c0_16, %c0_17] : memref<6x64xf32, #tpu.memory_space<vmem>>, vector<6x64xf32>
    %cst_18 = arith.constant dense<0.000000e+00> : vector<32x64xf32>
    %52 = tpu.matmul %49, %51, %cst_18 {dimension_numbers = #tpu.dot_dimension_numbers<[1], [0], [0], [1], [0, 0, 1, 1], [], []>} : vector<32x6xf32>, vector<6x64xf32>, vector<32x64xf32> -> vector<32x64xf32>
    %c0_19 = arith.constant 0 : index
    %c0_20 = arith.constant 0 : index
    %53 = vector.load %arg3[%c0_19, %c0_20] : memref<5x64xf32, #tpu.memory_space<vmem>>, vector<5x64xf32>
    %cst_21 = arith.constant dense<0.000000e+00> : vector<32x64xf32>
    %54 = tpu.matmul %50, %53, %cst_21 {dimension_numbers = #tpu.dot_dimension_numbers<[1], [0], [0], [1], [0, 0, 1, 1], [], []>} : vector<32x5xf32>, vector<5x64xf32>, vector<32x64xf32> -> vector<32x64xf32>
    %55 = arith.addf %52, %54 : vector<32x64xf32>
    %56 = vector.shape_cast %48 : vector<4x8xf32> to vector<32x1xf32>
    %57 = vector.broadcast %56 : vector<32x1xf32> to vector<32x64xf32>
    %58 = arith.divf %55, %57 : vector<32x64xf32>
    %c0_22 = arith.constant 0 : index
    %c0_23 = arith.constant 0 : index
    %c0_24 = arith.constant 0 : index
    %59 = vector.load %arg8[%c0_22, %c0_23, %c0_24] : memref<4x8x64xf32, #tpu.memory_space<vmem>>, vector<4x8x64xf32>
    %60 = vector.shape_cast %59 : vector<4x8x64xf32> to vector<32x64xf32>
    %61 = arith.mulf %60, %58 : vector<32x64xf32>
    %cst_25 = arith.constant dense<0.000000e+00> : vector<32xf32>
    %62 = vector.multi_reduction <add>, %61, %cst_25 [1] : vector<32x64xf32> to vector<32xf32>
    %63 = vector.shape_cast %62 : vector<32xf32> to vector<32x1xf32>
    %c0_26 = arith.constant 0 : index
    %c0_27 = arith.constant 0 : index
    %64 = vector.load %arg9[%c0_26, %c0_27] : memref<64x16xf32, #tpu.memory_space<vmem>>, vector<64x16xf32>
    %cst_28 = arith.constant dense<0.000000e+00> : vector<32x16xf32>
    %65 = tpu.matmul %58, %64, %cst_28 {dimension_numbers = #tpu.dot_dimension_numbers<[1], [0], [0], [1], [0, 0, 1, 1], [], []>} : vector<32x64xf32>, vector<64x16xf32>, vector<32x16xf32> -> vector<32x16xf32>
    %c0_29 = arith.constant 0 : index
    %c0_30 = arith.constant 0 : index
    %66 = vector.load %arg10[%c0_29, %c0_30] : memref<1x16xf32, #tpu.memory_space<vmem>>, vector<1x16xf32>
    %67 = vector.broadcast %66 : vector<1x16xf32> to vector<32x16xf32>
    %68 = arith.addf %65, %67 : vector<32x16xf32>
    %69 = vector.broadcast %63 : vector<32x1xf32> to vector<32x16xf32>
    %70 = arith.addf %68, %69 : vector<32x16xf32>
    %cst_31 = arith.constant dense<0xFF800000> : vector<32xf32>
    %71 = vector.multi_reduction <maximumf>, %70, %cst_31 [1] : vector<32x16xf32> to vector<32xf32>
    %72 = vector.shape_cast %71 : vector<32xf32> to vector<32x1xf32>
    %73 = vector.broadcast %72 : vector<32x1xf32> to vector<32x16xf32>
    %74 = arith.subf %70, %73 : vector<32x16xf32>
    %75 = math.exp %74 : vector<32x16xf32>
    %cst_32 = arith.constant dense<0.000000e+00> : vector<32xf32>
    %76 = vector.multi_reduction <add>, %75, %cst_32 [1] : vector<32x16xf32> to vector<32xf32>
    %77 = vector.shape_cast %76 : vector<32xf32> to vector<32x1xf32>
    %78 = math.log %77 : vector<32x1xf32>
    %79 = arith.addf %72, %78 : vector<32x1xf32>
    %80 = vector.broadcast %79 : vector<32x1xf32> to vector<32x16xf32>
    %81 = arith.subf %70, %80 : vector<32x16xf32>
    %82 = vector.shape_cast %81 : vector<32x16xf32> to vector<4x8x16xf32>
    %c0_33 = arith.constant 0 : index
    %c0_34 = arith.constant 0 : index
    %c0_35 = arith.constant 0 : index
    %83 = vector.load %arg11[%c0_33, %c0_34, %c0_35] : memref<4x8x16xf32, #tpu.memory_space<vmem>>, vector<4x8x16xf32>
    %84 = arith.mulf %82, %83 : vector<4x8x16xf32>
    %cst_36 = arith.constant dense<0.000000e+00> : vector<4x8xf32>
    %85 = vector.multi_reduction <add>, %84, %cst_36 [2] : vector<4x8x16xf32> to vector<4x8xf32>
    %c0_37 = arith.constant 0 : index
    %c0_38 = arith.constant 0 : index
    %86 = vector.load %arg12[%c0_37, %c0_38] : memref<4x8xf32, #tpu.memory_space<vmem>>, vector<4x8xf32>
    tpu.vector_store %arg12[%c0_37, %c0_38], %85 {strides = array<i32>} : memref<4x8xf32, #tpu.memory_space<vmem>>, vector<4x8xf32>,
    return
  }
}

</mosaic_0001>

<llo_original>
// kernel: multire_forward.1
$region0: #{multire_forward.1}
  #allocation0 [shape = 'u32[]', space=smem, size = 0x4, offset = 0x4, fixed_abs, tag = 'smem constant byte address 0x4 - core index']
  #allocation1 [shape = 'u32[144,128]{1,0:T(1,128)}', space=vmem, size = 0x12000, scoped, tag = 'internal scratch']
  %s0 = inlined_call_operand.vmem [shape: f32[8,6], index: 0, kind: input, shape index: {}]
  %s1 = inlined_call_operand.vmem [shape: f32[8,5], index: 1, kind: input, shape index: {}]
  %s2 = inlined_call_operand.vmem [shape: f32[6,64], index: 2, kind: input, shape index: {}]
  %s3 = inlined_call_operand.vmem [shape: f32[5,64], index: 3, kind: input, shape index: {}]
  %s4 = inlined_call_operand.vmem [shape: s32[4,1], index: 4, kind: input, shape index: {}]
  %s5 = inlined_call_operand.vmem [shape: s32[4,1], index: 5, kind: input, shape index: {}]
  %s6 = inlined_call_operand.vmem [shape: s32[4,1], index: 6, kind: input, shape index: {}]
  %s7 = inlined_call_operand.vmem [shape: s32[4,1], index: 7, kind: input, shape index: {}]
  %s8 = inlined_call_operand.vmem [shape: f32[4,8,64], index: 8, kind: input, shape index: {}]
  %s9 = inlined_call_operand.vmem [shape: f32[64,16], index: 9, kind: input, shape index: {}]
  %s10 = inlined_call_operand.vmem [shape: f32[1,16], index: 10, kind: input, shape index: {}]
  %s11 = inlined_call_operand.vmem [shape: f32[4,8,16], index: 11, kind: input, shape index: {}]
  %s12 = inlined_call_operand.hbm [shape: f32[4,8], index: 12, kind: output, shape index: {}]
  %s13 = sld [smem:[#allocation0]]
  $region58: #{multire_forward.1} parent=0
    _
  %s15 = ssub.s32 1, %s13
  %s16 = scalar_select 0, %s15, %s13
  $region1: #{multire_forward.1} parent=0
    #allocation2 [shape = 'u8[2048]{0}', space=vmem, size = 0x800, scoped, tag = 'output window, operand 0, single buffered']
    #allocation3 [shape = 's32[1]{0}', space=sflag, size = 0x4, scoped, tag = 'scoped memory for multire_forward.1']
    %17 = vsyncpa [#allocation3], 0
    // Predicated region
    $region2: #{multire_forward.1} parent=1 // pred_check
      _
    $region3: #{multire_forward.1} parent=1 // pred_check_branch
      %19 = sbr.rel (0) target = $region5
    $region4: #{multire_forward.1} parent=1 // pred_region
      _
    $region5: #{multire_forward.1} parent=1 // pred_fallthru
      _
    // Predicated region
    $region6: #{multire_forward.1} parent=1 // pred_check
      _
    $region7: #{multire_forward.1} parent=1 // pred_check_branch
      %21 = sbr.rel (0) target = $region9
    $region8: #{multire_forward.1} parent=1 // pred_region
      _
    $region9: #{multire_forward.1} parent=1 // pred_fallthru
      _
    // Predicated region
    $region10: #{multire_forward.1} parent=1 // pred_check
      _
    $region11: #{multire_forward.1} parent=1 // pred_check_branch
      %23 = sbr.rel (0) target = $region13
    $region12: #{multire_forward.1} parent=1 // pred_region
      _
    $region13: #{multire_forward.1} parent=1 // pred_fallthru
      _
    // Predicated region
    $region14: #{multire_forward.1} parent=1 // pred_check
      _
    $region15: #{multire_forward.1} parent=1 // pred_check_branch
      %25 = sbr.rel (0) target = $region17
    $region16: #{multire_forward.1} parent=1 // pred_region
      _
    $region17: #{multire_forward.1} parent=1 // pred_fallthru
      _
    // Predicated region
    $region18: #{multire_forward.1} parent=1 // pred_check
      _
    $region19: #{multire_forward.1} parent=1 // pred_check_branch
      %27 = sbr.rel (0) target = $region21
    $region20: #{multire_forward.1} parent=1 // pred_region
      _
    $region21: #{multire_forward.1} parent=1 // pred_fallthru
      _
    // Predicated region
    $region22: #{multire_forward.1} parent=1 // pred_check
      _
    $region23: #{multire_forward.1} parent=1 // pred_check_branch
      %29 = sbr.rel (0) target = $region25
    $region24: #{multire_forward.1} parent=1 // pred_region
      _
    $region25: #{multire_forward.1} parent=1 // pred_fallthru
      _
    // Predicated region
    $region26: #{multire_forward.1} parent=1 // pred_check
      _
    $region27: #{multire_forward.1} parent=1 // pred_check_branch
      %31 = sbr.rel (0) target = $region29
    $region28: #{multire_forward.1} parent=1 // pred_region
      _
    $region29: #{multire_forward.1} parent=1 // pred_fallthru
      _
    // Predicated region
    $region30: #{multire_forward.1} parent=1 // pred_check
      _
    $region31: #{multire_forward.1} parent=1 // pred_check_branch
      %33 = sbr.rel (0) target = $region33
    $region32: #{multire_forward.1} parent=1 // pred_region
      _
    $region33: #{multire_forward.1} parent=1 // pred_fallthru
      _
    // Predicated region
    $region34: #{multire_forward.1} parent=1 // pred_check
      _
    $region35: #{multire_forward.1} parent=1 // pred_check_branch
      %35 = sbr.rel (0) target = $region37
    $region36: #{multire_forward.1} parent=1 // pred_region
      _
    $region37: #{multire_forward.1} parent=1 // pred_fallthru
      _
    // Predicated region
    $region38: #{multire_forward.1} parent=1 // pred_check
      _
    $region39: #{multire_forward.1} parent=1 // pred_check_branch
      %37 = sbr.rel (0) target = $region41
    $region40: #{multire_forward.1} parent=1 // pred_region
      _
    $region41: #{multire_forward.1} parent=1 // pred_fallthru
      _
    // Predicated region
    $region42: #{multire_forward.1} parent=1 // pred_check
      _
    $region43: #{multire_forward.1} parent=1 // pred_check_branch
      %39 = sbr.rel (0) target = $region45
    $region44: #{multire_forward.1} parent=1 // pred_region
      _
    $region45: #{multire_forward.1} parent=1 // pred_fallthru
      _
    // Predicated region
    $region46: #{multire_forward.1} parent=1 // pred_check
      _
    $region47: #{multire_forward.1} parent=1 // pred_check_branch
      %41 = sbr.rel (0) target = $region49
    $region48: #{multire_forward.1} parent=1 // pred_region
      _
    $region49: #{multire_forward.1} parent=1 // pred_fallthru
      _
    %v42 = vld [vmem:[%s4] sm:$0xf]
    %v43 = vld [vmem:[%s5] sm:$0xf]
    %v44 = vld [vmem:[%s6] sm:$0xf]
    %v45 = vld [vmem:[%s7] sm:$0xf]
    %v46 = vlaneseq
    %v47 = vand.u32 %v46, 127
    %48 = vset.pattern.permute.xlu0 0
    %49 = vperm.xlu0 %48, %v42
    %v50 = vpop.permute.xlu0 %49
    %vm51 = vcmp.ge.s32.totalorder %v47, %v50
    %v52 = vadd.s32 %v42, %v43
    %53 = vset.pattern.permute.xlu0 0
    %54 = vperm.xlu0 %53, %v52
    %v55 = vpop.permute.xlu0 %54
    %vm56 = vcmp.lt.s32.totalorder %v47, %v55
    %vm57 = vmand %vm51, %vm56
    %58 = vset.pattern.permute.xlu0 0
    %59 = vperm.xlu0 %58, %v44
    %v60 = vpop.permute.xlu0 %59
    %vm61 = vcmp.ge.s32.totalorder %v47, %v60
    %v62 = vadd.s32 %v44, %v45
    %63 = vset.pattern.permute.xlu0 0
    %64 = vperm.xlu0 %63, %v62
    %v65 = vpop.permute.xlu0 %64
    %vm66 = vcmp.lt.s32.totalorder %v47, %v65
    %vm67 = vmand %vm61, %vm66
    %v68 = vld [vmem:[%s0] sm:$0xff]
    %v69 = vld [vmem:[%s1] sm:$0xff]
    %v70 = vsel %vm57, 1, 0
    %v72 = vunpack.c.l.s4 1966171168
    %v73 = vunpack.c.0.s8 %v72
    %v74 = vlaneseq
    %v75 = vshrl.u32 %v74, 7
    %v76 = vsub.s32 %v73, %v75
    %v77 = vrot.slane %v70, %v76
    %v78 = vcombine.high %v77, %v77
    %v80 = vunpack.c.l.s4 1966171168
    %v81 = vunpack.c.0.s8 %v80
    %v82 = vlaneseq
    %v83 = vshrl.u32 %v82, 7
    %v84 = vsub.s32 %v81, %v83
    %v85 = vrot.slane %v77, %v84
    %v87 = vunpack.c.l.s4 1966171168
    %v88 = vunpack.c.0.s8 %v87
    %v89 = vlaneseq
    %v90 = vshrl.u32 %v89, 7
    %v91 = vsub.s32 %v88, %v90
    %v92 = vrot.slane %v78, %v91
    %v93 = vcombine.high %v85, %v85
    %v94 = vcombine.high %v92, %v92
    %vm95 = vcmp.ne.s32.totalorder %v85, 0
    %vm96 = vcmp.ne.s32.totalorder %v92, 0
    %vm97 = vcmp.ne.s32.totalorder %v93, 0
    %vm98 = vcmp.ne.s32.totalorder %v94, 0
    %v99 = vsel %vm95, 1, 0
    %v100 = vsel %vm96, 1, 0
    %v101 = vsel %vm97, 1, 0
    %v102 = vsel %vm98, 1, 0
    %v103 = vlaneseq
    %v104 = vshrl.u32 %v103, 7
    %v105 = vsub.s32 0, %v104
    %v106 = vrot.slane %v99, %v105
    %v107 = vlaneseq
    %v108 = vshrl.u32 %v107, 7
    %v109 = vsub.s32 0, %v108
    %v110 = vrot.slane %v100, %v109
    %v111 = vlaneseq
    %v112 = vshrl.u32 %v111, 7
    %v113 = vsub.s32 0, %v112
    %v114 = vrot.slane %v101, %v113
    %v115 = vlaneseq
    %v116 = vshrl.u32 %v115, 7
    %v117 = vsub.s32 0, %v116
    %v118 = vrot.slane %v102, %v117
    %vm119 = vcmp.eq.s32.totalorder %v106, 1
    %vm120 = vcmp.eq.s32.totalorder %v110, 1
    %vm121 = vcmp.eq.s32.totalorder %v114, 1
    %vm122 = vcmp.eq.s32.totalorder %v118, 1
    %v123 = vsel %vm119, %v68, -1e+30
    %v124 = vsel %vm120, %v68, -1e+30
    %v125 = vsel %vm121, %v68, -1e+30
    %v126 = vsel %vm122, %v68, -1e+30
    %v127 = vsel %vm67, 1, 0
    %v129 = vunpack.c.l.s4 1966171168
    %v130 = vunpack.c.0.s8 %v129
    %v131 = vlaneseq
    %v132 = vshrl.u32 %v131, 7
    %v133 = vsub.s32 %v130, %v132
    %v134 = vrot.slane %v127, %v133
    %v135 = vcombine.high %v134, %v134
    %v137 = vunpack.c.l.s4 1966171168
    %v138 = vunpack.c.0.s8 %v137
    %v139 = vlaneseq
    %v140 = vshrl.u32 %v139, 7
    %v141 = vsub.s32 %v138, %v140
    %v142 = vrot.slane %v134, %v141
    %v144 = vunpack.c.l.s4 1966171168
    %v145 = vunpack.c.0.s8 %v144
    %v146 = vlaneseq
    %v147 = vshrl.u32 %v146, 7
    %v148 = vsub.s32 %v145, %v147
    %v149 = vrot.slane %v135, %v148
    %v150 = vcombine.high %v142, %v142
    %v151 = vcombine.high %v149, %v149
    %vm152 = vcmp.ne.s32.totalorder %v142, 0
    %vm153 = vcmp.ne.s32.totalorder %v149, 0
    %vm154 = vcmp.ne.s32.totalorder %v150, 0
    %vm155 = vcmp.ne.s32.totalorder %v151, 0
    %v156 = vsel %vm152, 1, 0
    %v157 = vsel %vm153, 1, 0
    %v158 = vsel %vm154, 1, 0
    %v159 = vsel %vm155, 1, 0
    %v160 = vlaneseq
    %v161 = vshrl.u32 %v160, 7
    %v162 = vsub.s32 0, %v161
    %v163 = vrot.slane %v156, %v162
    %v164 = vlaneseq
    %v165 = vshrl.u32 %v164, 7
    %v166 = vsub.s32 0, %v165
    %v167 = vrot.slane %v157, %v166
    %v168 = vlaneseq
    %v169 = vshrl.u32 %v168, 7
    %v170 = vsub.s32 0, %v169
    %v171 = vrot.slane %v158, %v170
    %v172 = vlaneseq
    %v173 = vshrl.u32 %v172, 7
    %v174 = vsub.s32 0, %v173
    %v175 = vrot.slane %v159, %v174
    %vm176 = vcmp.eq.s32.totalorder %v163, 1
    %vm177 = vcmp.eq.s32.totalorder %v167, 1
    %vm178 = vcmp.eq.s32.totalorder %v171, 1
    %vm179 = vcmp.eq.s32.totalorder %v175, 1
    %v180 = vsel %vm176, %v69, -1e+30
    %v181 = vsel %vm177, %v69, -1e+30
    %v182 = vsel %vm178, %v69, -1e+30
    %v183 = vsel %vm179, %v69, -1e+30
    %vm184 = vcmask 48128
    %v185 = vsel %vm184, %v123, -inf
    %186 = vmax.xlane.f32.xlu0 %v185
    %v187 = vpop.xlane.xlu0 %186
    %v188 = vsel %vm184, %v124, -inf
    %189 = vmax.xlane.f32.xlu0 %v188
    %v190 = vpop.xlane.xlu0 %189
    %v191 = vsel %vm184, %v125, -inf
    %192 = vmax.xlane.f32.xlu0 %v191
    %v193 = vpop.xlane.xlu0 %192
    %v194 = vsel %vm184, %v126, -inf
    %195 = vmax.xlane.f32.xlu0 %v194
    %v196 = vpop.xlane.xlu0 %195
    %vm197 = vcmask 39936
    %v198 = vsel %vm197, %v180, -inf
    %199 = vmax.xlane.f32.xlu0 %v198
    %v200 = vpop.xlane.xlu0 %199
    %v201 = vsel %vm197, %v181, -inf
    %202 = vmax.xlane.f32.xlu0 %v201
    %v203 = vpop.xlane.xlu0 %202
    %v204 = vsel %vm197, %v182, -inf
    %205 = vmax.xlane.f32.xlu0 %v204
    %v206 = vpop.xlane.xlu0 %205
    %v207 = vsel %vm197, %v183, -inf
    %208 = vmax.xlane.f32.xlu0 %v207
    %v209 = vpop.xlane.xlu0 %208
    %v210 = vmax.f32 %v187, %v200
    %v211 = vmax.f32 %v190, %v203
    %v212 = vmax.f32 %v193, %v206
    %v213 = vmax.f32 %v196, %v209
    %v214 = vsub.f32 %v123, %v210
    %v215 = vsub.f32 %v124, %v211
    %v216 = vsub.f32 %v125, %v212
    %v217 = vsub.f32 %v126, %v213
    %v218 = vmul.f32 %v214, 1.442695
    %v219 = vpow.pop %v218
    %v220 = vmul.f32 %v215, 1.442695
    %v221 = vpow.pop %v220
    %v222 = vmul.f32 %v216, 1.442695
    %v223 = vpow.pop %v222
    %v224 = vmul.f32 %v217, 1.442695
    %v225 = vpow.pop %v224
    %v226 = vsub.f32 %v180, %v210
    %v227 = vsub.f32 %v181, %v211
    %v228 = vsub.f32 %v182, %v212
    %v229 = vsub.f32 %v183, %v213
    %v230 = vmul.f32 %v226, 1.442695
    %v231 = vpow.pop %v230
    %v232 = vmul.f32 %v227, 1.442695
    %v233 = vpow.pop %v232
    %v234 = vmul.f32 %v228, 1.442695
    %v235 = vpow.pop %v234
    %v236 = vmul.f32 %v229, 1.442695
    %v237 = vpow.pop %v236
    %v238 = vsel %vm184, %v219, 0.0
    %239 = vadd.xlane.f32.xlu0 %v238
    %v240 = vpop.xlane.xlu0 %239
    %v241 = vsel %vm184, %v221, 0.0
    %242 = vadd.xlane.f32.xlu0 %v241
    %v243 = vpop.xlane.xlu0 %242
    %v244 = vsel %vm184, %v223, 0.0
    %245 = vadd.xlane.f32.xlu0 %v244
    %v246 = vpop.xlane.xlu0 %245
    %v247 = vsel %vm184, %v225, 0.0
    %248 = vadd.xlane.f32.xlu0 %v247
    %v249 = vpop.xlane.xlu0 %248
    %v250 = vsel %vm197, %v231, 0.0
    %251 = vadd.xlane.f32.xlu0 %v250
    %v252 = vpop.xlane.xlu0 %251
    %v253 = vsel %vm197, %v233, 0.0
    %254 = vadd.xlane.f32.xlu0 %v253
    %v255 = vpop.xlane.xlu0 %254
    %v256 = vsel %vm197, %v235, 0.0
    %257 = vadd.xlane.f32.xlu0 %v256
    %v258 = vpop.xlane.xlu0 %257
    %v259 = vsel %vm197, %v237, 0.0
    %260 = vadd.xlane.f32.xlu0 %v259
    %v261 = vpop.xlane.xlu0 %260
    %v262 = vadd.f32 %v240, %v252
    %v263 = vadd.f32 %v243, %v255
    %v264 = vadd.f32 %v246, %v258
    %v265 = vadd.f32 %v249, %v261
    %v266 = vld [vmem:[%s2] sm:$0x3f]
    %v267 = vld [vmem:[%s3] sm:$0x1f]
    %v269 = vsel %vm197, %v231, 0
    %v272 = vsel %vm197, %v233, 0
    %v275 = vsel %vm197, %v235, 0
    %v278 = vsel %vm197, %v237, 0
    %vm280 = vcmask 1044480
    %v282 = vsel %vm280, %v267, 0
    %284 = vmatprep.subr.mxu0 0.0
    %285 = vmatpush1.msra.mxu0 %v282
    %286 = vmatprep.subr.mxu0 0.0
    %287 = vmatpush1.msra.mxu0 0.0
    %288 = vmatprep.subr.mxu0 0.0
    %289 = vmatpush1.msra.mxu0 0.0
    %290 = vmatprep.subr.mxu0 0.0
    %291 = vmatpush1.msra.mxu0 0.0
    %292 = vmatprep.subr.mxu0 0.0
    %293 = vmatpush1.msra.mxu0 0.0
    %294 = vmatprep.subr.mxu0 0.0
    %295 = vmatpush1.msra.mxu0 0.0
    %296 = vmatprep.subr.mxu0 0.0
    %297 = vmatpush1.msra.mxu0 0.0
    %298 = vmatprep.subr.mxu0 0.0
    %299 = vmatpush1.msra.mxu0 0.0
    %300 = vmatprep.subr.mxu0 0.0
    %301 = vmatpush1.msra.mxu0 0.0
    %302 = vmatprep.subr.mxu0 0.0
    %303 = vmatpush1.msra.mxu0 0.0
    %304 = vmatprep.subr.mxu0 0.0
    %305 = vmatpush1.msra.mxu0 0.0
    %306 = vmatprep.subr.mxu0 0.0
    %307 = vmatpush1.msra.mxu0 0.0
    %308 = vmatprep.subr.mxu0 0.0
    %309 = vmatpush1.msra.mxu0 0.0
    %310 = vmatprep.subr.mxu0 0.0
    %311 = vmatpush1.msra.mxu0 0.0
    %312 = vmatprep.subr.mxu0 0.0
    %313 = vmatpush1.msra.mxu0 0.0
    %314 = vmatprep.subr.mxu0 0.0
    %315 = vmatpush1.msra.mxu0 0.0
    %316 = vmatprep.subr.mxu0 0.0
    %317 = vmatpush1.msra.mxu0 0.0
    %318 = vmatprep.subr.mxu0 0.0
    %319 = vmatpush1.msra.mxu0 0.0
    %320 = vmatprep.subr.mxu0 0.0
    %321 = vmatpush1.msra.mxu0 0.0
    %322 = vmatprep.subr.mxu0 0.0
    %323 = vmatpush1.msra.mxu0 0.0
    %324 = vmatprep.subr.mxu0 0.0
    %325 = vmatpush1.msra.mxu0 0.0
    %326 = vmatprep.subr.mxu0 0.0
    %327 = vmatpush1.msra.mxu0 0.0
    %328 = vmatprep.subr.mxu0 0.0
    %329 = vmatpush1.msra.mxu0 0.0
    %330 = vmatprep.subr.mxu0 0.0
    %331 = vmatpush1.msra.mxu0 0.0
    %332 = vmatprep.subr.mxu0 0.0
    %333 = vmatpush1.msra.mxu0 0.0
    %334 = vmatprep.subr.mxu0 0.0
    %335 = vmatpush1.msra.mxu0 0.0
    %336 = vmatprep.subr.mxu0 0.0
    %337 = vmatpush1.msra.mxu0 0.0
    %338 = vmatprep.subr.mxu0 0.0
    %339 = vmatpush1.msra.mxu0 0.0
    %340 = vmatprep.subr.mxu0 0.0
    %341 = vmatpush1.msra.mxu0 0.0
    %342 = vmatprep.subr.mxu0 0.0
    %343 = vmatpush1.msra.mxu0 0.0
    %344 = vmatprep.subr.mxu0 0.0
    %345 = vmatpush1.msra.mxu0 0.0
    %346 = vmatprep.subr.mxu0 0.0
    %347 = vmatpush1.msra.mxu0 0.0
    %348 = vmatprep.mubr.f32.mxu0 0.0
    %349 = vmatmul.mubr.f32.gmra.mrb[0].mxu0 %v269
    %v350 = vpop.f32.mrb[0].mxu0
    %v351 = vadd.f32 0.0, %v350
    %v352 = vpop.f32.mrb[0].mxu0
    %353 = vmatprep.mubr.f32.mxu0 0.0
    %354 = vmatmul.mubr.f32.gmra.mrb[0].mxu0 %v272
    %v355 = vpop.f32.mrb[0].mxu0
    %v356 = vadd.f32 0.0, %v355
    %v357 = vpop.f32.mrb[0].mxu0
    %358 = vmatprep.mubr.f32.mxu0 0.0
    %359 = vmatmul.mubr.f32.gmra.mrb[0].mxu0 %v275
    %v360 = vpop.f32.mrb[0].mxu0
    %v361 = vadd.f32 0.0, %v360
    %v362 = vpop.f32.mrb[0].mxu0
    %363 = vmatprep.mubr.f32.mxu0 0.0
    %364 = vmatmul.mubr.f32.gmra.mrb[0].mxu0 %v278
    %v365 = vpop.f32.mrb[0].mxu0
    %v366 = vadd.f32 0.0, %v365
    %v367 = vpop.f32.mrb[0].mxu0
    %368 = vdwg.mxu0
    %v370 = vsel %vm184, %v219, 0
    %v373 = vsel %vm184, %v221, 0
    %v376 = vsel %vm184, %v223, 0
    %v379 = vsel %vm184, %v225, 0
    %vm381 = vcmask 1045504
    %v383 = vsel %vm381, %v266, 0
    %385 = vmatprep.subr.mxu0 0.0
    %386 = vmatpush1.msra.mxu0 %v383
    %387 = vmatprep.subr.mxu0 0.0
    %388 = vmatpush1.msra.mxu0 0.0
    %389 = vmatprep.subr.mxu0 0.0
    %390 = vmatpush1.msra.mxu0 0.0
    %391 = vmatprep.subr.mxu0 0.0
    %392 = vmatpush1.msra.mxu0 0.0
    %393 = vmatprep.subr.mxu0 0.0
    %394 = vmatpush1.msra.mxu0 0.0
    %395 = vmatprep.subr.mxu0 0.0
    %396 = vmatpush1.msra.mxu0 0.0
    %397 = vmatprep.subr.mxu0 0.0
    %398 = vmatpush1.msra.mxu0 0.0
    %399 = vmatprep.subr.mxu0 0.0
    %400 = vmatpush1.msra.mxu0 0.0
    %401 = vmatprep.subr.mxu0 0.0
    %402 = vmatpush1.msra.mxu0 0.0
    %403 = vmatprep.subr.mxu0 0.0
    %404 = vmatpush1.msra.mxu0 0.0
    %405 = vmatprep.subr.mxu0 0.0
    %406 = vmatpush1.msra.mxu0 0.0
    %407 = vmatprep.subr.mxu0 0.0
    %408 = vmatpush1.msra.mxu0 0.0
    %409 = vmatprep.subr.mxu0 0.0
    %410 = vmatpush1.msra.mxu0 0.0
    %411 = vmatprep.subr.mxu0 0.0
    %412 = vmatpush1.msra.mxu0 0.0
    %413 = vmatprep.subr.mxu0 0.0
    %414 = vmatpush1.msra.mxu0 0.0
    %415 = vmatprep.subr.mxu0 0.0
    %416 = vmatpush1.msra.mxu0 0.0
    %417 = vmatprep.subr.mxu0 0.0
    %418 = vmatpush1.msra.mxu0 0.0
    %419 = vmatprep.subr.mxu0 0.0
    %420 = vmatpush1.msra.mxu0 0.0
    %421 = vmatprep.subr.mxu0 0.0
    %422 = vmatpush1.msra.mxu0 0.0
    %423 = vmatprep.subr.mxu0 0.0
    %424 = vmatpush1.msra.mxu0 0.0
    %425 = vmatprep.subr.mxu0 0.0
    %426 = vmatpush1.msra.mxu0 0.0
    %427 = vmatprep.subr.mxu0 0.0
    %428 = vmatpush1.msra.mxu0 0.0
    %429 = vmatprep.subr.mxu0 0.0
    %430 = vmatpush1.msra.mxu0 0.0
    %431 = vmatprep.subr.mxu0 0.0
    %432 = vmatpush1.msra.mxu0 0.0
    %433 = vmatprep.subr.mxu0 0.0
    %434 = vmatpush1.msra.mxu0 0.0
    %435 = vmatprep.subr.mxu0 0.0
    %436 = vmatpush1.msra.mxu0 0.0
    %437 = vmatprep.subr.mxu0 0.0
    %438 = vmatpush1.msra.mxu0 0.0
    %439 = vmatprep.subr.mxu0 0.0
    %440 = vmatpush1.msra.mxu0 0.0
    %441 = vmatprep.subr.mxu0 0.0
    %442 = vmatpush1.msra.mxu0 0.0
    %443 = vmatprep.subr.mxu0 0.0
    %444 = vmatpush1.msra.mxu0 0.0
    %445 = vmatprep.subr.mxu0 0.0
    %446 = vmatpush1.msra.mxu0 0.0
    %447 = vmatprep.subr.mxu0 0.0
    %448 = vmatpush1.msra.mxu0 0.0
    %449 = vmatprep.mubr.f32.mxu0 0.0
    %450 = vmatmul.mubr.f32.gmra.mrb[0].mxu0 %v370
    %v451 = vpop.f32.mrb[0].mxu0
    %v452 = vadd.f32 %v351, %v451
    %v453 = vpop.f32.mrb[0].mxu0
    %454 = vmatprep.mubr.f32.mxu0 0.0
    %455 = vmatmul.mubr.f32.gmra.mrb[0].mxu0 %v373
    %v456 = vpop.f32.mrb[0].mxu0
    %v457 = vadd.f32 %v356, %v456
    %v458 = vpop.f32.mrb[0].mxu0
    %459 = vmatprep.mubr.f32.mxu0 0.0
    %460 = vmatmul.mubr.f32.gmra.mrb[0].mxu0 %v376
    %v461 = vpop.f32.mrb[0].mxu0
    %v462 = vadd.f32 %v361, %v461
    %v463 = vpop.f32.mrb[0].mxu0
    %464 = vmatprep.mubr.f32.mxu0 0.0
    %465 = vmatmul.mubr.f32.gmra.mrb[0].mxu0 %v379
    %v466 = vpop.f32.mrb[0].mxu0
    %v467 = vadd.f32 %v366, %v466
    %v468 = vpop.f32.mrb[0].mxu0
    %469 = vdwg.mxu0
    %v470 = vrcp.pop %v262
    %v471 = vmul.f32 %v452, %v470
    %v472 = vrcp.pop %v263
    %v473 = vmul.f32 %v457, %v472
    %v474 = vrcp.pop %v264
    %v475 = vmul.f32 %v462, %v474
    %v476 = vrcp.pop %v265
    %v477 = vmul.f32 %v467, %v476
    %v478 = vld [vmem:[%s8] sm:$0xff]
    %v479 = vld [vmem:[%s8 + $0x8] sm:$0xff]
    %v480 = vld [vmem:[%s8 + $0x10] sm:$0xff]
    %v481 = vld [vmem:[%s8 + $0x18] sm:$0xff]
    %v482 = vmul.f32 %v478, %v471
    %v483 = vmul.f32 %v479, %v473
    %v484 = vmul.f32 %v480, %v475
    %v485 = vmul.f32 %v481, %v477
    %vm486 = vcmask 523264
    %v487 = vsel %vm486, %v482, 0.0
    %488 = vadd.xlane.f32.xlu0 %v487
    %v489 = vpop.xlane.xlu0 %488
    %v490 = vsel %vm486, %v483, 0.0
    %491 = vadd.xlane.f32.xlu0 %v490
    %v492 = vpop.xlane.xlu0 %491
    %v493 = vsel %vm486, %v484, 0.0
    %494 = vadd.xlane.f32.xlu0 %v493
    %v495 = vpop.xlane.xlu0 %494
    %v496 = vsel %vm486, %v485, 0.0
    %497 = vadd.xlane.f32.xlu0 %v496
    %v498 = vpop.xlane.xlu0 %497
    %v499 = vld [vmem:[%s9] sm:$0xff]
    %v500 = vld [vmem:[%s9 + $0x8] sm:$0xff]
    %v501 = vld [vmem:[%s9 + $0x10] sm:$0xff]
    %v502 = vld [vmem:[%s9 + $0x18] sm:$0xff]
    %v503 = vld [vmem:[%s9 + $0x20] sm:$0xff]
    %v504 = vld [vmem:[%s9 + $0x28] sm:$0xff]
    %v505 = vld [vmem:[%s9 + $0x30] sm:$0xff]
    %v506 = vld [vmem:[%s9 + $0x38] sm:$0xff]
    %v507 = vld [vmem:[%s10] sm:$0x1]
    %v509 = vlaneseq
    %v510 = vshrl.u32 %v509, 7
    %v511 = vsub.s32 0, %v510
    %v512 = vrot.slane %v507, %v511
    %v515 = vsel %vm486, %v471, 0
    %v518 = vsel %vm486, %v473, 0
    %v521 = vsel %vm486, %v475, 0
    %v524 = vsel %vm486, %v477, 0
    %526 = vmatprep.subr.mxu0 0.0
    %527 = vmatpush1.msra.mxu0 %v499
    %528 = vmatprep.subr.mxu0 0.0
    %529 = vmatpush1.msra.mxu0 %v500
    %530 = vmatprep.subr.mxu0 0.0
    %531 = vmatpush1.msra.mxu0 %v501
    %532 = vmatprep.subr.mxu0 0.0
    %533 = vmatpush1.msra.mxu0 %v502
    %534 = vmatprep.subr.mxu0 0.0
    %535 = vmatpush1.msra.mxu0 %v503
    %536 = vmatprep.subr.mxu0 0.0
    %537 = vmatpush1.msra.mxu0 %v504
    %538 = vmatprep.subr.mxu0 0.0
    %539 = vmatpush1.msra.mxu0 %v505
    %540 = vmatprep.subr.mxu0 0.0
    %541 = vmatpush1.msra.mxu0 %v506
    %542 = vmatprep.subr.mxu0 0.0
    %543 = vmatpush1.msra.mxu0 0.0
    %544 = vmatprep.subr.mxu0 0.0
    %545 = vmatpush1.msra.mxu0 0.0
    %546 = vmatprep.subr.mxu0 0.0
    %547 = vmatpush1.msra.mxu0 0.0
    %548 = vmatprep.subr.mxu0 0.0
    %549 = vmatpush1.msra.mxu0 0.0
    %550 = vmatprep.subr.mxu0 0.0
    %551 = vmatpush1.msra.mxu0 0.0
    %552 = vmatprep.subr.mxu0 0.0
    %553 = vmatpush1.msra.mxu0 0.0
    %554 = vmatprep.subr.mxu0 0.0
    %555 = vmatpush1.msra.mxu0 0.0
    %556 = vmatprep.subr.mxu0 0.0
    %557 = vmatpush1.msra.mxu0 0.0
    %558 = vmatprep.subr.mxu0 0.0
    %559 = vmatpush1.msra.mxu0 0.0
    %560 = vmatprep.subr.mxu0 0.0
    %561 = vmatpush1.msra.mxu0 0.0
    %562 = vmatprep.subr.mxu0 0.0
    %563 = vmatpush1.msra.mxu0 0.0
    %564 = vmatprep.subr.mxu0 0.0
    %565 = vmatpush1.msra.mxu0 0.0
    %566 = vmatprep.subr.mxu0 0.0
    %567 = vmatpush1.msra.mxu0 0.0
    %568 = vmatprep.subr.mxu0 0.0
    %569 = vmatpush1.msra.mxu0 0.0
    %570 = vmatprep.subr.mxu0 0.0
    %571 = vmatpush1.msra.mxu0 0.0
    %572 = vmatprep.subr.mxu0 0.0
    %573 = vmatpush1.msra.mxu0 0.0
    %574 = vmatprep.subr.mxu0 0.0
    %575 = vmatpush1.msra.mxu0 0.0
    %576 = vmatprep.subr.mxu0 0.0
    %577 = vmatpush1.msra.mxu0 0.0
    %578 = vmatprep.subr.mxu0 0.0
    %579 = vmatpush1.msra.mxu0 0.0
    %580 = vmatprep.subr.mxu0 0.0
    %581 = vmatpush1.msra.mxu0 0.0
    %582 = vmatprep.subr.mxu0 0.0
    %583 = vmatpush1.msra.mxu0 0.0
    %584 = vmatprep.subr.mxu0 0.0
    %585 = vmatpush1.msra.mxu0 0.0
    %586 = vmatprep.subr.mxu0 0.0
    %587 = vmatpush1.msra.mxu0 0.0
    %588 = vmatprep.subr.mxu0 0.0
    %589 = vmatpush1.msra.mxu0 0.0
    %590 = vmatprep.mubr.f32.mxu0 0.0
    %591 = vmatmul.mubr.f32.gmra.mrb[0].mxu0 %v515
    %v592 = vpop.f32.mrb[0].mxu0
    %v593 = vadd.f32 %v512, %v592
    %v594 = vpop.f32.mrb[0].mxu0
    %595 = vmatprep.mubr.f32.mxu0 0.0
    %596 = vmatmul.mubr.f32.gmra.mrb[0].mxu0 %v518
    %v597 = vpop.f32.mrb[0].mxu0
    %v598 = vadd.f32 %v512, %v597
    %v599 = vpop.f32.mrb[0].mxu0
    %600 = vmatprep.mubr.f32.mxu0 0.0
    %601 = vmatmul.mubr.f32.gmra.mrb[0].mxu0 %v521
    %v602 = vpop.f32.mrb[0].mxu0
    %v603 = vadd.f32 %v512, %v602
    %v604 = vpop.f32.mrb[0].mxu0
    %605 = vmatprep.mubr.f32.mxu0 0.0
    %606 = vmatmul.mubr.f32.gmra.mrb[0].mxu0 %v524
    %v607 = vpop.f32.mrb[0].mxu0
    %v608 = vadd.f32 %v512, %v607
    %v609 = vpop.f32.mrb[0].mxu0
    %610 = vdwg.mxu0
    %v611 = vadd.f32 %v593, %v489
    %v612 = vadd.f32 %v598, %v492
    %v613 = vadd.f32 %v603, %v495
    %v614 = vadd.f32 %v608, %v498
    %vm615 = vcmask 130048
    %v616 = vsel %vm615, %v611, -inf
    %617 = vmax.xlane.f32.xlu0 %v616
    %v618 = vpop.xlane.xlu0 %617
    %v619 = vsel %vm615, %v612, -inf
    %620 = vmax.xlane.f32.xlu0 %v619
    %v621 = vpop.xlane.xlu0 %620
    %v622 = vsel %vm615, %v613, -inf
    %623 = vmax.xlane.f32.xlu0 %v622
    %v624 = vpop.xlane.xlu0 %623
    %v625 = vsel %vm615, %v614, -inf
    %626 = vmax.xlane.f32.xlu0 %v625
    %v627 = vpop.xlane.xlu0 %626
    %v628 = vsub.f32 %v611, %v618
    %v629 = vsub.f32 %v612, %v621
    %v630 = vsub.f32 %v613, %v624
    %v631 = vsub.f32 %v614, %v627
    %v632 = vmul.f32 %v628, 1.442695
    %v633 = vpow.pop %v632
    %v634 = vmul.f32 %v629, 1.442695
    %v635 = vpow.pop %v634
    %v636 = vmul.f32 %v630, 1.442695
    %v637 = vpow.pop %v636
    %v638 = vmul.f32 %v631, 1.442695
    %v639 = vpow.pop %v638
    %v640 = vsel %vm615, %v633, 0.0
    %641 = vadd.xlane.f32.xlu0 %v640
    %v642 = vpop.xlane.xlu0 %641
    %v643 = vsel %vm615, %v635, 0.0
    %644 = vadd.xlane.f32.xlu0 %v643
    %v645 = vpop.xlane.xlu0 %644
    %v646 = vsel %vm615, %v637, 0.0
    %647 = vadd.xlane.f32.xlu0 %v646
    %v648 = vpop.xlane.xlu0 %647
    %v649 = vsel %vm615, %v639, 0.0
    %650 = vadd.xlane.f32.xlu0 %v649
    %v651 = vpop.xlane.xlu0 %650
    %v652 = vlog2.pop %v642
    %v653 = vmul.f32 %v652, 0.6931472
    %v654 = vlog2.pop %v645
    %v655 = vmul.f32 %v654, 0.6931472
    %v656 = vlog2.pop %v648
    %v657 = vmul.f32 %v656, 0.6931472
    %v658 = vlog2.pop %v651
    %v659 = vmul.f32 %v658, 0.6931472
    %v660 = vadd.f32 %v618, %v653
    %v661 = vadd.f32 %v621, %v655
    %v662 = vadd.f32 %v624, %v657
    %v663 = vadd.f32 %v627, %v659
    %v664 = vsub.f32 %v611, %v660
    %v665 = vsub.f32 %v612, %v661
    %v666 = vsub.f32 %v613, %v662
    %v667 = vsub.f32 %v614, %v663
    %v668 = vld [vmem:[%s11] sm:$0xff]
    %v669 = vld [vmem:[%s11 + $0x8] sm:$0xff]
    %v670 = vld [vmem:[%s11 + $0x10] sm:$0xff]
    %v671 = vld [vmem:[%s11 + $0x18] sm:$0xff]
    %v672 = vmul.f32 %v664, %v668
    %v673 = vmul.f32 %v665, %v669
    %v674 = vmul.f32 %v666, %v670
    %v675 = vmul.f32 %v667, %v671
    %v676 = vsel %vm615, %v672, 0.0
    %677 = vadd.xlane.f32.xlu0 %v676
    %v678 = vpop.xlane.xlu0 %677
    %v679 = vsel %vm615, %v673, 0.0
    %680 = vadd.xlane.f32.xlu0 %v679
    %v681 = vpop.xlane.xlu0 %680
    %v682 = vsel %vm615, %v674, 0.0
    %683 = vadd.xlane.f32.xlu0 %v682
    %v684 = vpop.xlane.xlu0 %683
    %v685 = vsel %vm615, %v675, 0.0
    %686 = vadd.xlane.f32.xlu0 %v685
    %v687 = vpop.xlane.xlu0 %686
    %v692 = vlaneseq
    %v693 = vshrl.u32 %v692, 7
    %v694 = vsub.s32 %v47, %v693
    %v695 = vrot.slane %v678, %v694
    %v696 = vlaneseq
    %v697 = vshrl.u32 %v696, 7
    %v698 = vsub.s32 %v47, %v697
    %v699 = vrot.slane %v681, %v698
    %v700 = vlaneseq
    %v701 = vshrl.u32 %v700, 7
    %v702 = vsub.s32 %v47, %v701
    %v703 = vrot.slane %v684, %v702
    %v704 = vlaneseq
    %v705 = vshrl.u32 %v704, 7
    %v706 = vsub.s32 %v47, %v705
    %v707 = vrot.slane %v687, %v706
    %vm708 = vcmask 1041409
    %v709 = vsel %vm708, %v699, %v695
    %vm710 = vcmask 1042434
    %v711 = vsel %vm710, %v703, %v709
    %vm712 = vcmask 1043459
    %v713 = vsel %vm712, %v707, %v711
    %vm715 = vcmask 60416
    %716 = vst.msk [vmem:[#allocation2] sm:$0xf] %vm715, %v713
    // Predicated region
    $region50: #{multire_forward.1} parent=1 // pred_check
      _
    $region51: #{multire_forward.1} parent=1 // pred_check_branch
      %718 = sbr.rel (0) target = $region53
    $region52: #{multire_forward.1} parent=1 // pred_region
      %s720 = ssub.s32 64, 64
      %721 = vsyncadd [#allocation3], %s720
      %s723 = sshll.u32 [#allocation2], 4
      %s724 = int_to_ptr.vmem [resolvable:$true] %s723
      %726 = dma.vmem_to_hbm [thread:$0]  %s724, 64, %s12, [#allocation3]
    $region53: #{multire_forward.1} parent=1 // pred_fallthru
      _
    // Predicated region
    $region54: #{multire_forward.1} parent=1 // pred_check
      _
    $region55: #{multire_forward.1} parent=1 // pred_check_branch
      %728 = sbr.rel (0) target = $region57
    $region56: #{multire_forward.1} parent=1 // pred_region
      %729 = dma.done [#allocation3], 64
    $region57: #{multire_forward.1} parent=1 // pred_fallthru
      _
    %730 = vsyncpa [#allocation3], 1

</llo_original>
